<compile_context>
chip_gen: v5e
topology: v5e:2x2
jax: 0.10.0
libtpu: 0.0.40
codegen_flags: <defaults>
</compile_context>

<pallas_src>
import math
import functools

import jax
import jax.numpy as jnp
from jax import lax
from jax.experimental import pallas as pl
from jax.experimental.pallas import tpu as pltpu


# ---------------------------------------------------------------------------
# Fused encoder-layer kernel (one grid step == one batch element)
# ---------------------------------------------------------------------------
def _encoder_layer_kernel(x_ref, mask_ref,
                          wqkv_ref, bqkv_ref, wo_ref,
                          vecs_ref,                    # (6, D): bo, g1, b1n, b2, g2, b2n
                          w1_ref, b1_ref, w2_ref,
                          o_ref,
                          qkv_ref,                     # VMEM scratch (S, 3D)
                          *, heads, scale):
    _, S, D = x_ref.shape
    dk = D // heads
    x = x_ref[0]                                       # (S, D)

    # ---- fused QKV projection: one (S, 3D) MXU pass -----------------------
    qkv_ref[...] = (jnp.dot(x, wqkv_ref[...],
                            preferred_element_type=jnp.float32)
                    + bqkv_ref[...])

    # Hoist the mask comparison out of the per-head loop (VPU select reuse).
    masked = mask_ref[...] == 0                        # (S, S) bool

    bo = vecs_ref[0:1, :]                              # (1, D)

    # ---- per-head attention + output projection (heads statically unrolled)
    # Residual + output-projection bias are the accumulator seed; each head
    # contributes a K-split slice of the (D, D) output projection.
    z = x + bo                                         # (S, D) f32
    for h in range(heads):
        q = qkv_ref[:, h * dk:(h + 1) * dk] * scale            # (S, dk)
        k = qkv_ref[:, D + h * dk:D + (h + 1) * dk]            # (S, dk)
        v = qkv_ref[:, 2 * D + h * dk:2 * D + (h + 1) * dk]    # (S, dk)

        # q @ k^T via dot_general -- no materialized transpose.
        scores = lax.dot_general(q, k, (((1,), (1,)), ((), ())),
                                 preferred_element_type=jnp.float32)
        scores = jnp.where(masked, -1.0e9, scores)
        scores = scores - jnp.max(scores, axis=-1, keepdims=True)
        p = jnp.exp(scores)
        p = p * pl.reciprocal(jnp.sum(p, axis=-1, keepdims=True), approx=True)
        ctx_h = jnp.dot(p, v, preferred_element_type=jnp.float32)   # (S, dk)

        # concat-free output projection:
        #   concat_h(ctx_h) @ Wo == sum_h ctx_h @ Wo[h*dk:(h+1)*dk, :]
        z = z + jnp.dot(ctx_h, wo_ref[h * dk:(h + 1) * dk, :],
                        preferred_element_type=jnp.float32)

    # ---- residual + LayerNorm 1 (biased variance, eps=1e-5, like torch) ---
    ln1_g = vecs_ref[1:2, :]
    ln1_b = vecs_ref[2:3, :]
    mean = jnp.mean(z, axis=-1, keepdims=True)
    var = jnp.mean((z - mean) ** 2, axis=-1, keepdims=True)
    x1 = (z - mean) * lax.rsqrt(var + 1e-5) * ln1_g + ln1_b

    # ---- feed-forward: fc1 + ReLU + fc2 ------------------------------------
    h1 = jnp.dot(x1, w1_ref[...], preferred_element_type=jnp.float32) + b1_ref[...]
    h1 = jnp.maximum(h1, 0.0)
    b2 = vecs_ref[3:4, :]
    z2 = x1 + b2 + jnp.dot(h1, w2_ref[...], preferred_element_type=jnp.float32)

    # ---- residual + LayerNorm 2 --------------------------------------------
    ln2_g = vecs_ref[4:5, :]
    ln2_b = vecs_ref[5:6, :]
    mean2 = jnp.mean(z2, axis=-1, keepdims=True)
    var2 = jnp.mean((z2 - mean2) ** 2, axis=-1, keepdims=True)
    out = (z2 - mean2) * lax.rsqrt(var2 + 1e-5) * ln2_g + ln2_b

    o_ref[0] = out.astype(o_ref.dtype)


# ---------------------------------------------------------------------------
# Wrapper
# ---------------------------------------------------------------------------
def encoder_layer_forward(x, params, heads, mask=None):
    """x: (B, S, D) f32; mask: (S, S) (0 == masked) or None."""
    B, S, D = x.shape
    d_ff = params["w1"].shape[1]
    if mask is None:
        mask = jnp.ones((S, S), jnp.int32)
    mask = mask.astype(jnp.int32)

    # Fused QKV weights: (D, 3D), bias (1, 3D).
    wqkv = jnp.concatenate([params["wq"], params["wk"], params["wv"]], axis=1)
    bqkv = jnp.concatenate([params["bq"], params["bk"], params["bv"]]).reshape(1, 3 * D)

    # Pack the six (D,) vectors into one operand -> fewer tiny input DMAs.
    vecs = jnp.stack([params["bo"], params["ln1_g"], params["ln1_b"],
                      params["b2"], params["ln2_g"], params["ln2_b"]], axis=0)

    kernel = functools.partial(_encoder_layer_kernel, heads=heads,
                               scale=1.0 / math.sqrt(D // heads))

    def const(i):
        return (0, 0)

    return pl.pallas_call(
        kernel,
        out_shape=jax.ShapeDtypeStruct((B, S, D), jnp.float32),
        grid=(B,),
        in_specs=[
            pl.BlockSpec((1, S, D), lambda i: (i, 0, 0)),   # x
            pl.BlockSpec((S, S), const),                    # mask
            pl.BlockSpec((D, 3 * D), const),                # wqkv
            pl.BlockSpec((1, 3 * D), const),                # bqkv
            pl.BlockSpec((D, D), const),                    # wo
            pl.BlockSpec((6, D), const),                    # packed vectors
            pl.BlockSpec((D, d_ff), const),                 # w1
            pl.BlockSpec((1, d_ff), const),                 # b1
            pl.BlockSpec((d_ff, D), const),                 # w2
        ],
        out_specs=pl.BlockSpec((1, S, D), lambda i: (i, 0, 0)),
        scratch_shapes=[pltpu.VMEM((S, 3 * D), jnp.float32)],
        compiler_params=pltpu.CompilerParams(
            dimension_semantics=("parallel",)),
    )(x, mask, wqkv, bqkv, params["wo"], vecs,
      params["w1"], params["b1"].reshape(1, d_ff), params["w2"])


# ---------------------------------------------------------------------------
# Pure-JAX reference (mirrors the PyTorch module, dropout = identity)
# ---------------------------------------------------------------------------
def encoder_layer_reference(x, params, heads, mask=None):
    B, S, D = x.shape
    dk = D // heads

    def lin(t, w, b):
        return t @ w + b

    q = lin(x, params["wq"], params["bq"]).reshape(B, S, heads, dk).transpose(0, 2, 1, 3)
    k = lin(x, params["wk"], params["bk"]).reshape(B, S, heads, dk).transpose(0, 2, 1, 3)
    v = lin(x, params["wv"], params["bv"]).reshape(B, S, heads, dk).transpose(0, 2, 1, 3)
    scores = jnp.einsum("bhqd,bhkd->bhqk", q, k) / math.sqrt(dk)
    if mask is not None:
        scores = jnp.where(mask == 0, -1.0e9, scores)
    attn = jax.nn.softmax(scores, axis=-1)
    ctx = jnp.einsum("bhqk,bhkd->bhqd", attn, v).transpose(0, 2, 1, 3).reshape(B, S, D)
    attn_out = lin(ctx, params["wo"], params["bo"])

    def ln(z, g, b):
        m = z.mean(-1, keepdims=True)
        var = ((z - m) ** 2).mean(-1, keepdims=True)
        return (z - m) / jnp.sqrt(var + 1e-5) * g + b

    x1 = ln(x + attn_out, params["ln1_g"], params["ln1_b"])
    h1 = jnp.maximum(lin(x1, params["w1"], params["b1"]), 0.0)
    ff = lin(h1, params["w2"], params["b2"])
    return ln(x1 + ff, params["ln2_g"], params["ln2_b"])


# ---------------------------------------------------------------------------
# Deterministic parameter init (PyTorch-style uniform fan-in init)
# ---------------------------------------------------------------------------
def init_encoder_layer_params(key, d_model, d_ff):
    ks = jax.random.split(key, 12)

    def lin(kw, kb, fan_in, fan_out):
        bound = 1.0 / math.sqrt(fan_in)
        w = jax.random.uniform(kw, (fan_in, fan_out), jnp.float32, -bound, bound)
        b = jax.random.uniform(kb, (fan_out,), jnp.float32, -bound, bound)
        return w, b

    wq, bq = lin(ks[0], ks[1], d_model, d_model)
    wk, bk = lin(ks[2], ks[3], d_model, d_model)
    wv, bv = lin(ks[4], ks[5], d_model, d_model)
    wo, bo = lin(ks[6], ks[7], d_model, d_model)
    w1, b1 = lin(ks[8], ks[9], d_model, d_ff)
    w2, b2 = lin(ks[10], ks[11], d_ff, d_model)
    return {
        "wq": wq, "bq": bq, "wk": wk, "bk": bk, "wv": wv, "bv": bv,
        "wo": wo, "bo": bo,
        "w1": w1, "b1": b1, "w2": w2, "b2": b2,
        "ln1_g": jnp.ones((d_model,), jnp.float32),
        "ln1_b": jnp.zeros((d_model,), jnp.float32),
        "ln2_g": jnp.ones((d_model,), jnp.float32),
        "ln2_b": jnp.zeros((d_model,), jnp.float32),
    }


# ---------------------------------------------------------------------------
if __name__ == "__main__":
    d_model, heads, d_ff = 32, 4, 64
    B, S = 2, 8

    key = jax.random.PRNGKey(0)
    k_params, k_x = jax.random.split(key)

    params = init_encoder_layer_params(k_params, d_model, d_ff)
    x = jax.random.normal(k_x, (B, S, d_model), jnp.float32)

    # Run 1: mask=None (default EncoderLayer usage).
    out = encoder_layer_forward(x, params, heads, mask=None)
    out = jax.block_until_ready(out)
    ref = encoder_layer_reference(x, params, heads, mask=None)
    assert out.shape == (B, S, d_model) and out.dtype == jnp.float32
    assert bool(jnp.all(jnp.isfinite(out)))
    assert bool(jnp.allclose(out, ref, atol=2e-2, rtol=2e-2))

    # Run 2: with a padding mask (last two key positions hidden).
    mask = jnp.ones((S, S), jnp.int32).at[:, -2:].set(0)
    out_m = encoder_layer_forward(x, params, heads, mask=mask)
    out_m = jax.block_until_ready(out_m)
    ref_m = encoder_layer_reference(x, params, heads, mask=mask)
    assert bool(jnp.allclose(out_m, ref_m, atol=2e-2, rtol=2e-2))

    print("KERNEL_OK")
</pallas_src>

<mosaic_0001>
module attributes {stable_mosaic.version = 11 : i64} {
  func.func @_encoder_layer_kernel(%arg0: i32, %arg1: memref<1x8x32xf32, #tpu.memory_space<vmem>>, %arg2: memref<8x8xi32, #tpu.memory_space<vmem>>, %arg3: memref<32x96xf32, #tpu.memory_space<vmem>>, %arg4: memref<1x96xf32, #tpu.memory_space<vmem>>, %arg5: memref<32x32xf32, #tpu.memory_space<vmem>>, %arg6: memref<6x32xf32, #tpu.memory_space<vmem>>, %arg7: memref<32x64xf32, #tpu.memory_space<vmem>>, %arg8: memref<1x64xf32, #tpu.memory_space<vmem>>, %arg9: memref<64x32xf32, #tpu.memory_space<vmem>>, %arg10: memref<1x8x32xf32, #tpu.memory_space<vmem>>, %arg11: memref<8x96xf32, #tpu.memory_space<vmem>>) attributes {dimension_semantics = [#tpu.dimension_semantics<parallel>], iteration_bounds = array<i64: 2>, scalar_prefetch = 0 : i64, scratch_operands = 1 : i64, tpu.core_type = #tpu.core_type<tc>, window_params = [{transform_indices = @transform_0, window_bounds = array<i64: 1, 8, 32>}, {pipeline_mode = #tpu.pipeline_mode<synchronous>, transform_indices = @transform_1, window_bounds = array<i64: 8, 8>}, {pipeline_mode = #tpu.pipeline_mode<synchronous>, transform_indices = @transform_2, window_bounds = array<i64: 32, 96>}, {pipeline_mode = #tpu.pipeline_mode<synchronous>, transform_indices = @transform_3, window_bounds = array<i64: 1, 96>}, {pipeline_mode = #tpu.pipeline_mode<synchronous>, transform_indices = @transform_4, window_bounds = array<i64: 32, 32>}, {pipeline_mode = #tpu.pipeline_mode<synchronous>, transform_indices = @transform_5, window_bounds = array<i64: 6, 32>}, {pipeline_mode = #tpu.pipeline_mode<synchronous>, transform_indices = @transform_6, window_bounds = array<i64: 32, 64>}, {pipeline_mode = #tpu.pipeline_mode<synchronous>, transform_indices = @transform_7, window_bounds = array<i64: 1, 64>}, {pipeline_mode = #tpu.pipeline_mode<synchronous>, transform_indices = @transform_8, window_bounds = array<i64: 64, 32>}, {transform_indices = @transform_9, window_bounds = array<i64: 1, 8, 32>}]} {
    %c0 = arith.constant 0 : index
    %c0_0 = arith.constant 0 : index
    %c0_1 = arith.constant 0 : index
    %0 = vector.load %arg1[%c0, %c0_0, %c0_1] : memref<1x8x32xf32, #tpu.memory_space<vmem>>, vector<1x8x32xf32>
    %1 = vector.shape_cast %0 : vector<1x8x32xf32> to vector<8x32xf32>
    %c0_2 = arith.constant 0 : index
    %c0_3 = arith.constant 0 : index
    %2 = vector.load %arg3[%c0_2, %c0_3] : memref<32x96xf32, #tpu.memory_space<vmem>>, vector<32x96xf32>
    %cst = arith.constant dense<0.000000e+00> : vector<8x96xf32>
    %3 = tpu.matmul %1, %2, %cst {dimension_numbers = #tpu.dot_dimension_numbers<[1], [0], [0], [1], [0, 0, 1, 1], [], []>} : vector<8x32xf32>, vector<32x96xf32>, vector<8x96xf32> -> vector<8x96xf32>
    %c0_4 = arith.constant 0 : index
    %c0_5 = arith.constant 0 : index
    %4 = vector.load %arg4[%c0_4, %c0_5] : memref<1x96xf32, #tpu.memory_space<vmem>>, vector<1x96xf32>
    %5 = vector.broadcast %4 : vector<1x96xf32> to vector<8x96xf32>
    %6 = arith.addf %3, %5 : vector<8x96xf32>
    %c0_6 = arith.constant 0 : index
    %c0_7 = arith.constant 0 : index
    %7 = vector.load %arg11[%c0_6, %c0_7] : memref<8x96xf32, #tpu.memory_space<vmem>>, vector<8x96xf32>
    tpu.vector_store %arg11[%c0_6, %c0_7], %6 {strides = array<i32>} : memref<8x96xf32, #tpu.memory_space<vmem>>, vector<8x96xf32>,
    %c0_8 = arith.constant 0 : index
    %c0_9 = arith.constant 0 : index
    %8 = vector.load %arg2[%c0_8, %c0_9] : memref<8x8xi32, #tpu.memory_space<vmem>>, vector<8x8xi32>
    %c0_i32 = arith.constant 0 : i32
    %9 = vector.broadcast %c0_i32 : i32 to vector<8x8xi32>
    %10 = arith.cmpi eq, %8, %9 : vector<8x8xi32>
    %c0_10 = arith.constant 0 : index
    %c0_11 = arith.constant 0 : index
    %11 = vector.load %arg6[%c0_10, %c0_11] : memref<6x32xf32, #tpu.memory_space<vmem>>, vector<1x32xf32>
    %12 = vector.broadcast %11 : vector<1x32xf32> to vector<8x32xf32>
    %13 = arith.addf %1, %12 : vector<8x32xf32>
    %c0_12 = arith.constant 0 : index
    %c0_13 = arith.constant 0 : index
    %14 = vector.load %arg11[%c0_12, %c0_13] : memref<8x96xf32, #tpu.memory_space<vmem>>, vector<8x8xf32>
    %cst_14 = arith.constant 0.353553385 : f32
    %15 = vector.broadcast %cst_14 : f32 to vector<8x8xf32>
    %16 = arith.mulf %14, %15 : vector<8x8xf32>
    %c0_15 = arith.constant 0 : index
    %c32 = arith.constant 32 : index
    %17 = vector.load %arg11[%c0_15, %c32] : memref<8x96xf32, #tpu.memory_space<vmem>>, vector<8x8xf32>
    %c0_16 = arith.constant 0 : index
    %c64 = arith.constant 64 : index
    %18 = vector.load %arg11[%c0_16, %c64] : memref<8x96xf32, #tpu.memory_space<vmem>>, vector<8x8xf32>
    %cst_17 = arith.constant dense<0.000000e+00> : vector<8x8xf32>
    %19 = tpu.matmul %16, %17, %cst_17 {dimension_numbers = #tpu.dot_dimension_numbers<[1], [1], [0], [0], [0, 0, 1, 0], [], []>} : vector<8x8xf32>, vector<8x8xf32>, vector<8x8xf32> -> vector<8x8xf32>
    %cst_18 = arith.constant -1.000000e+09 : f32
    %20 = vector.broadcast %cst_18 : f32 to vector<8x8xf32>
    %21 = arith.select %10, %20, %19 : vector<8x8xi1>, vector<8x8xf32>
    %cst_19 = arith.constant dense<0xFF800000> : vector<8xf32>
    %22 = vector.multi_reduction <maximumf>, %21, %cst_19 [1] : vector<8x8xf32> to vector<8xf32>
    %23 = vector.shape_cast %22 : vector<8xf32> to vector<8x1xf32>
    %24 = vector.broadcast %23 : vector<8x1xf32> to vector<8x8xf32>
    %25 = arith.subf %21, %24 : vector<8x8xf32>
    %26 = math.exp %25 : vector<8x8xf32>
    %cst_20 = arith.constant dense<0.000000e+00> : vector<8xf32>
    %27 = vector.multi_reduction <add>, %26, %cst_20 [1] : vector<8x8xf32> to vector<8xf32>
    %28 = vector.shape_cast %27 : vector<8xf32> to vector<8x1xf32>
    %29 = tpu.reciprocal %28 {approx = true} : vector<8x1xf32> -> vector<8x1xf32>
    %30 = vector.broadcast %29 : vector<8x1xf32> to vector<8x8xf32>
    %31 = arith.mulf %26, %30 : vector<8x8xf32>
    %cst_21 = arith.constant dense<0.000000e+00> : vector<8x8xf32>
    %32 = tpu.matmul %31, %18, %cst_21 {dimension_numbers = #tpu.dot_dimension_numbers<[1], [0], [0], [1], [0, 0, 1, 1], [], []>} : vector<8x8xf32>, vector<8x8xf32>, vector<8x8xf32> -> vector<8x8xf32>
    %c0_22 = arith.constant 0 : index
    %c0_23 = arith.constant 0 : index
    %33 = vector.load %arg5[%c0_22, %c0_23] : memref<32x32xf32, #tpu.memory_space<vmem>>, vector<8x32xf32>
    %cst_24 = arith.constant dense<0.000000e+00> : vector<8x32xf32>
    %34 = tpu.matmul %32, %33, %cst_24 {dimension_numbers = #tpu.dot_dimension_numbers<[1], [0], [0], [1], [0, 0, 1, 1], [], []>} : vector<8x8xf32>, vector<8x32xf32>, vector<8x32xf32> -> vector<8x32xf32>
    %35 = arith.addf %13, %34 : vector<8x32xf32>
    %c0_25 = arith.constant 0 : index
    %c8 = arith.constant 8 : index
    %36 = vector.load %arg11[%c0_25, %c8] : memref<8x96xf32, #tpu.memory_space<vmem>>, vector<8x8xf32>
    %cst_26 = arith.constant 0.353553385 : f32
    %37 = vector.broadcast %cst_26 : f32 to vector<8x8xf32>
    %38 = arith.mulf %36, %37 : vector<8x8xf32>
    %c0_27 = arith.constant 0 : index
    %c40 = arith.constant 40 : index
    %39 = vector.load %arg11[%c0_27, %c40] : memref<8x96xf32, #tpu.memory_space<vmem>>, vector<8x8xf32>
    %c0_28 = arith.constant 0 : index
    %c72 = arith.constant 72 : index
    %40 = vector.load %arg11[%c0_28, %c72] : memref<8x96xf32, #tpu.memory_space<vmem>>, vector<8x8xf32>
    %cst_29 = arith.constant dense<0.000000e+00> : vector<8x8xf32>
    %41 = tpu.matmul %38, %39, %cst_29 {dimension_numbers = #tpu.dot_dimension_numbers<[1], [1], [0], [0], [0, 0, 1, 0], [], []>} : vector<8x8xf32>, vector<8x8xf32>, vector<8x8xf32> -> vector<8x8xf32>
    %cst_30 = arith.constant -1.000000e+09 : f32
    %42 = vector.broadcast %cst_30 : f32 to vector<8x8xf32>
    %43 = arith.select %10, %42, %41 : vector<8x8xi1>, vector<8x8xf32>
    %cst_31 = arith.constant dense<0xFF800000> : vector<8xf32>
    %44 = vector.multi_reduction <maximumf>, %43, %cst_31 [1] : vector<8x8xf32> to vector<8xf32>
    %45 = vector.shape_cast %44 : vector<8xf32> to vector<8x1xf32>
    %46 = vector.broadcast %45 : vector<8x1xf32> to vector<8x8xf32>
    %47 = arith.subf %43, %46 : vector<8x8xf32>
    %48 = math.exp %47 : vector<8x8xf32>
    %cst_32 = arith.constant dense<0.000000e+00> : vector<8xf32>
    %49 = vector.multi_reduction <add>, %48, %cst_32 [1] : vector<8x8xf32> to vector<8xf32>
    %50 = vector.shape_cast %49 : vector<8xf32> to vector<8x1xf32>
    %51 = tpu.reciprocal %50 {approx = true} : vector<8x1xf32> -> vector<8x1xf32>
    %52 = vector.broadcast %51 : vector<8x1xf32> to vector<8x8xf32>
    %53 = arith.mulf %48, %52 : vector<8x8xf32>
    %cst_33 = arith.constant dense<0.000000e+00> : vector<8x8xf32>
    %54 = tpu.matmul %53, %40, %cst_33 {dimension_numbers = #tpu.dot_dimension_numbers<[1], [0], [0], [1], [0, 0, 1, 1], [], []>} : vector<8x8xf32>, vector<8x8xf32>, vector<8x8xf32> -> vector<8x8xf32>
    %c8_34 = arith.constant 8 : index
    %c0_35 = arith.constant 0 : index
    %55 = vector.load %arg5[%c8_34, %c0_35] : memref<32x32xf32, #tpu.memory_space<vmem>>, vector<8x32xf32>
    %cst_36 = arith.constant dense<0.000000e+00> : vector<8x32xf32>
    %56 = tpu.matmul %54, %55, %cst_36 {dimension_numbers = #tpu.dot_dimension_numbers<[1], [0], [0], [1], [0, 0, 1, 1], [], []>} : vector<8x8xf32>, vector<8x32xf32>, vector<8x32xf32> -> vector<8x32xf32>
    %57 = arith.addf %35, %56 : vector<8x32xf32>
    %c0_37 = arith.constant 0 : index
    %c16 = arith.constant 16 : index
    %58 = vector.load %arg11[%c0_37, %c16] : memref<8x96xf32, #tpu.memory_space<vmem>>, vector<8x8xf32>
    %cst_38 = arith.constant 0.353553385 : f32
    %59 = vector.broadcast %cst_38 : f32 to vector<8x8xf32>
    %60 = arith.mulf %58, %59 : vector<8x8xf32>
    %c0_39 = arith.constant 0 : index
    %c48 = arith.constant 48 : index
    %61 = vector.load %arg11[%c0_39, %c48] : memref<8x96xf32, #tpu.memory_space<vmem>>, vector<8x8xf32>
    %c0_40 = arith.constant 0 : index
    %c80 = arith.constant 80 : index
    %62 = vector.load %arg11[%c0_40, %c80] : memref<8x96xf32, #tpu.memory_space<vmem>>, vector<8x8xf32>
    %cst_41 = arith.constant dense<0.000000e+00> : vector<8x8xf32>
    %63 = tpu.matmul %60, %61, %cst_41 {dimension_numbers = #tpu.dot_dimension_numbers<[1], [1], [0], [0], [0, 0, 1, 0], [], []>} : vector<8x8xf32>, vector<8x8xf32>, vector<8x8xf32> -> vector<8x8xf32>
    %cst_42 = arith.constant -1.000000e+09 : f32
    %64 = vector.broadcast %cst_42 : f32 to vector<8x8xf32>
    %65 = arith.select %10, %64, %63 : vector<8x8xi1>, vector<8x8xf32>
    %cst_43 = arith.constant dense<0xFF800000> : vector<8xf32>
    %66 = vector.multi_reduction <maximumf>, %65, %cst_43 [1] : vector<8x8xf32> to vector<8xf32>
    %67 = vector.shape_cast %66 : vector<8xf32> to vector<8x1xf32>
    %68 = vector.broadcast %67 : vector<8x1xf32> to vector<8x8xf32>
    %69 = arith.subf %65, %68 : vector<8x8xf32>
    %70 = math.exp %69 : vector<8x8xf32>
    %cst_44 = arith.constant dense<0.000000e+00> : vector<8xf32>
    %71 = vector.multi_reduction <add>, %70, %cst_44 [1] : vector<8x8xf32> to vector<8xf32>
    %72 = vector.shape_cast %71 : vector<8xf32> to vector<8x1xf32>
    %73 = tpu.reciprocal %72 {approx = true} : vector<8x1xf32> -> vector<8x1xf32>
    %74 = vector.broadcast %73 : vector<8x1xf32> to vector<8x8xf32>
    %75 = arith.mulf %70, %74 : vector<8x8xf32>
    %cst_45 = arith.constant dense<0.000000e+00> : vector<8x8xf32>
    %76 = tpu.matmul %75, %62, %cst_45 {dimension_numbers = #tpu.dot_dimension_numbers<[1], [0], [0], [1], [0, 0, 1, 1], [], []>} : vector<8x8xf32>, vector<8x8xf32>, vector<8x8xf32> -> vector<8x8xf32>
    %c16_46 = arith.constant 16 : index
    %c0_47 = arith.constant 0 : index
    %77 = vector.load %arg5[%c16_46, %c0_47] : memref<32x32xf32, #tpu.memory_space<vmem>>, vector<8x32xf32>
    %cst_48 = arith.constant dense<0.000000e+00> : vector<8x32xf32>
    %78 = tpu.matmul %76, %77, %cst_48 {dimension_numbers = #tpu.dot_dimension_numbers<[1], [0], [0], [1], [0, 0, 1, 1], [], []>} : vector<8x8xf32>, vector<8x32xf32>, vector<8x32xf32> -> vector<8x32xf32>
    %79 = arith.addf %57, %78 : vector<8x32xf32>
    %c0_49 = arith.constant 0 : index
    %c24 = arith.constant 24 : index
    %80 = vector.load %arg11[%c0_49, %c24] : memref<8x96xf32, #tpu.memory_space<vmem>>, vector<8x8xf32>
    %cst_50 = arith.constant 0.353553385 : f32
    %81 = vector.broadcast %cst_50 : f32 to vector<8x8xf32>
    %82 = arith.mulf %80, %81 : vector<8x8xf32>
    %c0_51 = arith.constant 0 : index
    %c56 = arith.constant 56 : index
    %83 = vector.load %arg11[%c0_51, %c56] : memref<8x96xf32, #tpu.memory_space<vmem>>, vector<8x8xf32>
    %c0_52 = arith.constant 0 : index
    %c88 = arith.constant 88 : index
    %84 = vector.load %arg11[%c0_52, %c88] : memref<8x96xf32, #tpu.memory_space<vmem>>, vector<8x8xf32>
    %cst_53 = arith.constant dense<0.000000e+00> : vector<8x8xf32>
    %85 = tpu.matmul %82, %83, %cst_53 {dimension_numbers = #tpu.dot_dimension_numbers<[1], [1], [0], [0], [0, 0, 1, 0], [], []>} : vector<8x8xf32>, vector<8x8xf32>, vector<8x8xf32> -> vector<8x8xf32>
    %cst_54 = arith.constant -1.000000e+09 : f32
    %86 = vector.broadcast %cst_54 : f32 to vector<8x8xf32>
    %87 = arith.select %10, %86, %85 : vector<8x8xi1>, vector<8x8xf32>
    %cst_55 = arith.constant dense<0xFF800000> : vector<8xf32>
    %88 = vector.multi_reduction <maximumf>, %87, %cst_55 [1] : vector<8x8xf32> to vector<8xf32>
    %89 = vector.shape_cast %88 : vector<8xf32> to vector<8x1xf32>
    %90 = vector.broadcast %89 : vector<8x1xf32> to vector<8x8xf32>
    %91 = arith.subf %87, %90 : vector<8x8xf32>
    %92 = math.exp %91 : vector<8x8xf32>
    %cst_56 = arith.constant dense<0.000000e+00> : vector<8xf32>
    %93 = vector.multi_reduction <add>, %92, %cst_56 [1] : vector<8x8xf32> to vector<8xf32>
    %94 = vector.shape_cast %93 : vector<8xf32> to vector<8x1xf32>
    %95 = tpu.reciprocal %94 {approx = true} : vector<8x1xf32> -> vector<8x1xf32>
    %96 = vector.broadcast %95 : vector<8x1xf32> to vector<8x8xf32>
    %97 = arith.mulf %92, %96 : vector<8x8xf32>
    %cst_57 = arith.constant dense<0.000000e+00> : vector<8x8xf32>
    %98 = tpu.matmul %97, %84, %cst_57 {dimension_numbers = #tpu.dot_dimension_numbers<[1], [0], [0], [1], [0, 0, 1, 1], [], []>} : vector<8x8xf32>, vector<8x8xf32>, vector<8x8xf32> -> vector<8x8xf32>
    %c24_58 = arith.constant 24 : index
    %c0_59 = arith.constant 0 : index
    %99 = vector.load %arg5[%c24_58, %c0_59] : memref<32x32xf32, #tpu.memory_space<vmem>>, vector<8x32xf32>
    %cst_60 = arith.constant dense<0.000000e+00> : vector<8x32xf32>
    %100 = tpu.matmul %98, %99, %cst_60 {dimension_numbers = #tpu.dot_dimension_numbers<[1], [0], [0], [1], [0, 0, 1, 1], [], []>} : vector<8x8xf32>, vector<8x32xf32>, vector<8x32xf32> -> vector<8x32xf32>
    %101 = arith.addf %79, %100 : vector<8x32xf32>
    %c1 = arith.constant 1 : index
    %c0_61 = arith.constant 0 : index
    %102 = vector.load %arg6[%c1, %c0_61] : memref<6x32xf32, #tpu.memory_space<vmem>>, vector<1x32xf32>
    %c2 = arith.constant 2 : index
    %c0_62 = arith.constant 0 : index
    %103 = vector.load %arg6[%c2, %c0_62] : memref<6x32xf32, #tpu.memory_space<vmem>>, vector<1x32xf32>
    %cst_63 = arith.constant dense<0.000000e+00> : vector<8xf32>
    %104 = vector.multi_reduction <add>, %101, %cst_63 [1] : vector<8x32xf32> to vector<8xf32>
    %105 = vector.shape_cast %104 : vector<8xf32> to vector<8x1xf32>
    %cst_64 = arith.constant 3.200000e+01 : f32
    %106 = vector.broadcast %cst_64 : f32 to vector<8x1xf32>
    %107 = arith.divf %105, %106 : vector<8x1xf32>
    %108 = vector.broadcast %107 : vector<8x1xf32> to vector<8x32xf32>
    %109 = arith.subf %101, %108 : vector<8x32xf32>
    %110 = arith.mulf %109, %109 : vector<8x32xf32>
    %cst_65 = arith.constant dense<0.000000e+00> : vector<8xf32>
    %111 = vector.multi_reduction <add>, %110, %cst_65 [1] : vector<8x32xf32> to vector<8xf32>
    %112 = vector.shape_cast %111 : vector<8xf32> to vector<8x1xf32>
    %cst_66 = arith.constant 3.200000e+01 : f32
    %113 = vector.broadcast %cst_66 : f32 to vector<8x1xf32>
    %114 = arith.divf %112, %113 : vector<8x1xf32>
    %115 = vector.broadcast %107 : vector<8x1xf32> to vector<8x32xf32>
    %116 = arith.subf %101, %115 : vector<8x32xf32>
    %cst_67 = arith.constant 9.99999974E-6 : f32
    %117 = vector.broadcast %cst_67 : f32 to vector<8x1xf32>
    %118 = arith.addf %114, %117 : vector<8x1xf32>
    %119 = math.rsqrt %118 : vector<8x1xf32>
    %120 = vector.broadcast %119 : vector<8x1xf32> to vector<8x32xf32>
    %121 = arith.mulf %116, %120 : vector<8x32xf32>
    %122 = vector.broadcast %102 : vector<1x32xf32> to vector<8x32xf32>
    %123 = arith.mulf %121, %122 : vector<8x32xf32>
    %124 = vector.broadcast %103 : vector<1x32xf32> to vector<8x32xf32>
    %125 = arith.addf %123, %124 : vector<8x32xf32>
    %c0_68 = arith.constant 0 : index
    %c0_69 = arith.constant 0 : index
    %126 = vector.load %arg7[%c0_68, %c0_69] : memref<32x64xf32, #tpu.memory_space<vmem>>, vector<32x64xf32>
    %cst_70 = arith.constant dense<0.000000e+00> : vector<8x64xf32>
    %127 = tpu.matmul %125, %126, %cst_70 {dimension_numbers = #tpu.dot_dimension_numbers<[1], [0], [0], [1], [0, 0, 1, 1], [], []>} : vector<8x32xf32>, vector<32x64xf32>, vector<8x64xf32> -> vector<8x64xf32>
    %c0_71 = arith.constant 0 : index
    %c0_72 = arith.constant 0 : index
    %128 = vector.load %arg8[%c0_71, %c0_72] : memref<1x64xf32, #tpu.memory_space<vmem>>, vector<1x64xf32>
    %129 = vector.broadcast %128 : vector<1x64xf32> to vector<8x64xf32>
    %130 = arith.addf %127, %129 : vector<8x64xf32>
    %cst_73 = arith.constant 0.000000e+00 : f32
    %131 = vector.broadcast %cst_73 : f32 to vector<8x64xf32>
    %132 = arith.maximumf %130, %131 : vector<8x64xf32>
    %c3 = arith.constant 3 : index
    %c0_74 = arith.constant 0 : index
    %133 = vector.load %arg6[%c3, %c0_74] : memref<6x32xf32, #tpu.memory_space<vmem>>, vector<1x32xf32>
    %134 = vector.broadcast %133 : vector<1x32xf32> to vector<8x32xf32>
    %135 = arith.addf %125, %134 : vector<8x32xf32>
    %c0_75 = arith.constant 0 : index
    %c0_76 = arith.constant 0 : index
    %136 = vector.load %arg9[%c0_75, %c0_76] : memref<64x32xf32, #tpu.memory_space<vmem>>, vector<64x32xf32>
    %cst_77 = arith.constant dense<0.000000e+00> : vector<8x32xf32>
    %137 = tpu.matmul %132, %136, %cst_77 {dimension_numbers = #tpu.dot_dimension_numbers<[1], [0], [0], [1], [0, 0, 1, 1], [], []>} : vector<8x64xf32>, vector<64x32xf32>, vector<8x32xf32> -> vector<8x32xf32>
    %138 = arith.addf %135, %137 : vector<8x32xf32>
    %c4 = arith.constant 4 : index
    %c0_78 = arith.constant 0 : index
    %139 = vector.load %arg6[%c4, %c0_78] : memref<6x32xf32, #tpu.memory_space<vmem>>, vector<1x32xf32>
    %c5 = arith.constant 5 : index
    %c0_79 = arith.constant 0 : index
    %140 = vector.load %arg6[%c5, %c0_79] : memref<6x32xf32, #tpu.memory_space<vmem>>, vector<1x32xf32>
    %cst_80 = arith.constant dense<0.000000e+00> : vector<8xf32>
    %141 = vector.multi_reduction <add>, %138, %cst_80 [1] : vector<8x32xf32> to vector<8xf32>
    %142 = vector.shape_cast %141 : vector<8xf32> to vector<8x1xf32>
    %cst_81 = arith.constant 3.200000e+01 : f32
    %143 = vector.broadcast %cst_81 : f32 to vector<8x1xf32>
    %144 = arith.divf %142, %143 : vector<8x1xf32>
    %145 = vector.broadcast %144 : vector<8x1xf32> to vector<8x32xf32>
    %146 = arith.subf %138, %145 : vector<8x32xf32>
    %147 = arith.mulf %146, %146 : vector<8x32xf32>
    %cst_82 = arith.constant dense<0.000000e+00> : vector<8xf32>
    %148 = vector.multi_reduction <add>, %147, %cst_82 [1] : vector<8x32xf32> to vector<8xf32>
    %149 = vector.shape_cast %148 : vector<8xf32> to vector<8x1xf32>
    %cst_83 = arith.constant 3.200000e+01 : f32
    %150 = vector.broadcast %cst_83 : f32 to vector<8x1xf32>
    %151 = arith.divf %149, %150 : vector<8x1xf32>
    %152 = vector.broadcast %144 : vector<8x1xf32> to vector<8x32xf32>
    %153 = arith.subf %138, %152 : vector<8x32xf32>
    %cst_84 = arith.constant 9.99999974E-6 : f32
    %154 = vector.broadcast %cst_84 : f32 to vector<8x1xf32>
    %155 = arith.addf %151, %154 : vector<8x1xf32>
    %156 = math.rsqrt %155 : vector<8x1xf32>
    %157 = vector.broadcast %156 : vector<8x1xf32> to vector<8x32xf32>
    %158 = arith.mulf %153, %157 : vector<8x32xf32>
    %159 = vector.broadcast %139 : vector<1x32xf32> to vector<8x32xf32>
    %160 = arith.mulf %158, %159 : vector<8x32xf32>
    %161 = vector.broadcast %140 : vector<1x32xf32> to vector<8x32xf32>
    %162 = arith.addf %160, %161 : vector<8x32xf32>
    %c0_85 = arith.constant 0 : index
    %c0_86 = arith.constant 0 : index
    %c0_87 = arith.constant 0 : index
    %163 = vector.load %arg10[%c0_85, %c0_86, %c0_87] : memref<1x8x32xf32, #tpu.memory_space<vmem>>, vector<1x8x32xf32>
    %164 = vector.shape_cast %163 : vector<1x8x32xf32> to vector<8x32xf32>
    %165 = vector.shape_cast %162 : vector<8x32xf32> to vector<1x8x32xf32>
    tpu.vector_store %arg10[%c0_85, %c0_86, %c0_87], %165 {strides = array<i32>} : memref<1x8x32xf32, #tpu.memory_space<vmem>>, vector<1x8x32xf32>,
    return
  }
  func.func @transform_0(%arg0: i32) -> (i32, i32, i32) {
    %c0_i32 = arith.constant 0 : i32
    %c0_i32_0 = arith.constant 0 : i32
    %c0_i32_1 = arith.constant 0 : i32
    return %arg0, %c0_i32, %c0_i32_0 : i32, i32, i32
  }
  func.func @transform_1(%arg0: i32) -> (i32, i32) {
    %c0_i32 = arith.constant 0 : i32
    %c0_i32_0 = arith.constant 0 : i32
    %c0_i32_1 = arith.constant 0 : i32
    return %c0_i32, %c0_i32_0 : i32, i32
  }
  func.func @transform_2(%arg0: i32) -> (i32, i32) {
    %c0_i32 = arith.constant 0 : i32
    %c0_i32_0 = arith.constant 0 : i32
    %c0_i32_1 = arith.constant 0 : i32
    return %c0_i32, %c0_i32_0 : i32, i32
  }
  func.func @transform_3(%arg0: i32) -> (i32, i32) {
    %c0_i32 = arith.constant 0 : i32
    %c0_i32_0 = arith.constant 0 : i32
    %c0_i32_1 = arith.constant 0 : i32
    return %c0_i32, %c0_i32_0 : i32, i32
  }
  func.func @transform_4(%arg0: i32) -> (i32, i32) {
    %c0_i32 = arith.constant 0 : i32
    %c0_i32_0 = arith.constant 0 : i32
    %c0_i32_1 = arith.constant 0 : i32
    return %c0_i32, %c0_i32_0 : i32, i32
  }
  func.func @transform_5(%arg0: i32) -> (i32, i32) {
    %c0_i32 = arith.constant 0 : i32
    %c0_i32_0 = arith.constant 0 : i32
    %c0_i32_1 = arith.constant 0 : i32
    return %c0_i32, %c0_i32_0 : i32, i32
  }
  func.func @transform_6(%arg0: i32) -> (i32, i32) {
    %c0_i32 = arith.constant 0 : i32
    %c0_i32_0 = arith.constant 0 : i32
    %c0_i32_1 = arith.constant 0 : i32
    return %c0_i32, %c0_i32_0 : i32, i32
  }
  func.func @transform_7(%arg0: i32) -> (i32, i32) {
    %c0_i32 = arith.constant 0 : i32
    %c0_i32_0 = arith.constant 0 : i32
    %c0_i32_1 = arith.constant 0 : i32
    return %c0_i32, %c0_i32_0 : i32, i32
  }
  func.func @transform_8(%arg0: i32) -> (i32, i32) {
    %c0_i32 = arith.constant 0 : i32
    %c0_i32_0 = arith.constant 0 : i32
    %c0_i32_1 = arith.constant 0 : i32
    return %c0_i32, %c0_i32_0 : i32, i32
  }
  func.func @transform_9(%arg0: i32) -> (i32, i32, i32) {
    %c0_i32 = arith.constant 0 : i32
    %c0_i32_0 = arith.constant 0 : i32
    %c0_i32_1 = arith.constant 0 : i32
    return %arg0, %c0_i32, %c0_i32_0 : i32, i32, i32
  }
}

</mosaic_0001>

<llo_original>
// kernel: tpu_custom_call.1
$region0: #{tpu_custom_call.1}
  #allocation0 [shape = 'u32[]', space=smem, size = 0x4, offset = 0x4, fixed_abs, tag = 'smem constant byte address 0x4 - core index']
  #allocation1 [shape = 'u32[72,128]{1,0:T(1,128)}', space=vmem, size = 0x9000, scoped, tag = 'internal scratch']
  #allocation2 [shape = 'f32[8,96]{1,0:T(8,128)}', space=vmem, size = 0x1000, scoped, tag = 'scratch operand']
  %s0 = inlined_call_operand.hbm [shape: f32[2,8,32], index: 0, kind: input, shape index: {}]
  %s1 = inlined_call_operand.hbm [shape: s32[8,8], index: 1, kind: input, shape index: {}]
  %s2 = inlined_call_operand.vmem [shape: f32[32,96], index: 2, kind: input, shape index: {}]
  %s3 = inlined_call_operand.vmem [shape: f32[1,96], index: 3, kind: input, shape index: {}]
  %s4 = inlined_call_operand.vmem [shape: f32[32,32], index: 4, kind: input, shape index: {}]
  %s5 = inlined_call_operand.hbm [shape: f32[6,32], index: 5, kind: input, shape index: {}]
  %s6 = inlined_call_operand.vmem [shape: f32[32,64], index: 6, kind: input, shape index: {}]
  %s7 = inlined_call_operand.vmem [shape: f32[1,64], index: 7, kind: input, shape index: {}]
  %s8 = inlined_call_operand.vmem [shape: f32[64,32], index: 8, kind: input, shape index: {}]
  %s9 = inlined_call_operand.hbm [shape: f32[2,8,32], index: 9, kind: output, shape index: {}]
  %s10 = sld [smem:[#allocation0]]
  $region81: #{tpu_custom_call.1} parent=0
    _
  %s12 = ssub.s32 1, %s10
  %s13 = scalar_select 0, %s12, %s10
  $region1: #{tpu_custom_call.1} parent=0
    #allocation3 [shape = 'u8[8192]{0}', space=vmem, size = 0x2000, scoped, tag = 'input window, operand 0']
    #allocation4 [shape = 's32[2]{0}', space=sflag, size = 0x8, scoped, tag = 'scoped memory for tpu_custom_call.1']
    #allocation5 [shape = 's32[2]{0}', space=sflag, size = 0x8, scoped, tag = 'scoped memory for tpu_custom_call.1']
    #allocation6 [shape = 'u8[4096]{0}', space=vmem, size = 0x1000, scoped, tag = 'input window, operand 1, single buffered']
    #allocation7 [shape = 's32[1]{0}', space=sflag, size = 0x4, scoped, tag = 'scoped memory for tpu_custom_call.1']
    #allocation8 [shape = 'u8[4096]{0}', space=vmem, size = 0x1000, scoped, tag = 'input window, operand 5, single buffered']
    #allocation9 [shape = 'u8[8192]{0}', space=vmem, size = 0x2000, scoped, tag = 'output window, operand 0']
    %14 = vsyncpa [#allocation4], 0
    %s15 = scalar_lea.sflag [#allocation4], 1
    %16 = vsyncpa %s15, 0
    %17 = vsyncpa [#allocation7], 0
    %18 = vsyncpa [#allocation5], 0
    %s19 = scalar_lea.sflag [#allocation5], 1
    %20 = vsyncpa %s19, 0
    loop: start=0, step=1, limit=4
    $region2: #{tpu_custom_call.1} parent=1 // loop_pre_header
      _
    $region3: #{tpu_custom_call.1} parent=1 // loop_header
      %s22 = sphi 0, %s26
      %p23 = scmp.ge.s32.totalorder %s22, 4
      %s32 = sphi 0, %s34
      %s35 = sphi 0, %s32
      %s36 = sphi 0, %s35
      %s52 = sphi 0, %s36
      %s56 = sphi 0, %s56
      %s58 = sphi 0, %s56
      %s59 = sphi 0, %s58
      %s73 = sphi 0, %s59
      %s77 = sphi 0, %s77
      %s79 = sphi 0, %s77
      %s80 = sphi 0, %s79
      %s94 = sphi 0, %s80
      %s98 = sphi 0, %s98
      %s100 = sphi 0, %s98
      %s101 = sphi 0, %s100
      %s115 = sphi 0, %s101
      %s119 = sphi 0, %s119
      %s121 = sphi 0, %s119
      %s122 = sphi 0, %s121
      %s136 = sphi 0, %s122
      %s140 = sphi 0, %s140
      %s142 = sphi 0, %s140
      %s143 = sphi 0, %s142
      %s157 = sphi 0, %s143
      %s161 = sphi 0, %s161
      %s163 = sphi 0, %s161
      %s164 = sphi 0, %s163
      %s178 = sphi 0, %s164
      %s182 = sphi 0, %s182
      %s184 = sphi 0, %s182
      %s185 = sphi 0, %s184
      %s199 = sphi 0, %s185
      %s203 = sphi 0, %s203
      %s205 = sphi 0, %s203
      %s206 = sphi 0, %s205
      %s220 = sphi 0, %s206
      %s226 = sphi 0, %s228
      %s229 = sphi 0, %s226
      %s230 = sphi 0, %s229
      %s246 = sphi 0, %s230
    $region4: #{tpu_custom_call.1} parent=1 // loop_header_branch
      %25 = sbr.rel (%p23) target = $region8
    $region5: #{tpu_custom_call.1} parent=1 // loop_body
      %s27 = ssub.s32 %s22, 1
      %s28 = ssub.s32 %s22, 2
      %s29 = sadd.s32 %s22, 1
      %s30 = ssub.s32 %s22, %s29
      %p31 = scmp.eq.s32.totalorder %s30, 0
      %s33 = sadd.s32 %s32, 1
      %s34 = scalar_select %p31, %s32, %s33
      %p37 = pneg %p31
      %p38 = scmp.eq.s32.totalorder %s22, 1
      %p39 = por %p37, %p38
      %p40 = scmp.ne.s32.totalorder %s32, %s35
      %p41 = scmp.eq.s32.totalorder %s22, 0
      %p42 = por %p40, %p41
      %p43 = scmp.ne.s32.totalorder %s32, %s35
      %p44 = scmp.eq.s32.totalorder %s27, 1
      %p45 = por %p43, %p44
      %p46 = scmp.ne.s32.totalorder %s35, %s36
      %p47 = scmp.eq.s32.totalorder %s27, 0
      %p48 = por %p46, %p47
      %p49 = scmp.ne.s32.totalorder %s35, %s36
      %p50 = scmp.eq.s32.totalorder %s28, 1
      %p51 = por %p49, %p50
      %p53 = scmp.ne.s32.totalorder %s36, %s52
      %p54 = scmp.eq.s32.totalorder %s28, 0
      %p55 = por %p53, %p54
      %s57 = sadd.s32 %s56, 1
      %p60 = scmp.eq.s32.totalorder %s22, 1
      %p61 = scmp.ne.s32.totalorder %s56, %s58
      %p62 = scmp.eq.s32.totalorder %s22, 0
      %p63 = por %p61, %p62
      %p64 = scmp.ne.s32.totalorder %s56, %s58
      %p65 = scmp.eq.s32.totalorder %s27, 1
      %p66 = por %p64, %p65
      %p67 = scmp.ne.s32.totalorder %s58, %s59
      %p68 = scmp.eq.s32.totalorder %s27, 0
      %p69 = por %p67, %p68
      %p70 = scmp.ne.s32.totalorder %s58, %s59
      %p71 = scmp.eq.s32.totalorder %s28, 1
      %p72 = por %p70, %p71
      %p74 = scmp.ne.s32.totalorder %s59, %s73
      %p75 = scmp.eq.s32.totalorder %s28, 0
      %p76 = por %p74, %p75
      %s78 = sadd.s32 %s77, 1
      %p81 = scmp.eq.s32.totalorder %s22, 1
      %p82 = scmp.ne.s32.totalorder %s77, %s79
      %p83 = scmp.eq.s32.totalorder %s22, 0
      %p84 = por %p82, %p83
      %p85 = scmp.ne.s32.totalorder %s77, %s79
      %p86 = scmp.eq.s32.totalorder %s27, 1
      %p87 = por %p85, %p86
      %p88 = scmp.ne.s32.totalorder %s79, %s80
      %p89 = scmp.eq.s32.totalorder %s27, 0
      %p90 = por %p88, %p89
      %p91 = scmp.ne.s32.totalorder %s79, %s80
      %p92 = scmp.eq.s32.totalorder %s28, 1
      %p93 = por %p91, %p92
      %p95 = scmp.ne.s32.totalorder %s80, %s94
      %p96 = scmp.eq.s32.totalorder %s28, 0
      %p97 = por %p95, %p96
      %s99 = sadd.s32 %s98, 1
      %p102 = scmp.eq.s32.totalorder %s22, 1
      %p103 = scmp.ne.s32.totalorder %s98, %s100
      %p104 = scmp.eq.s32.totalorder %s22, 0
      %p105 = por %p103, %p104
      %p106 = scmp.ne.s32.totalorder %s98, %s100
      %p107 = scmp.eq.s32.totalorder %s27, 1
      %p108 = por %p106, %p107
      %p109 = scmp.ne.s32.totalorder %s100, %s101
      %p110 = scmp.eq.s32.totalorder %s27, 0
      %p111 = por %p109, %p110
      %p112 = scmp.ne.s32.totalorder %s100, %s101
      %p113 = scmp.eq.s32.totalorder %s28, 1
      %p114 = por %p112, %p113
      %p116 = scmp.ne.s32.totalorder %s101, %s115
      %p117 = scmp.eq.s32.totalorder %s28, 0
      %p118 = por %p116, %p117
      %s120 = sadd.s32 %s119, 1
      %p123 = scmp.eq.s32.totalorder %s22, 1
      %p124 = scmp.ne.s32.totalorder %s119, %s121
      %p125 = scmp.eq.s32.totalorder %s22, 0
      %p126 = por %p124, %p125
      %p127 = scmp.ne.s32.totalorder %s119, %s121
      %p128 = scmp.eq.s32.totalorder %s27, 1
      %p129 = por %p127, %p128
      %p130 = scmp.ne.s32.totalorder %s121, %s122
      %p131 = scmp.eq.s32.totalorder %s27, 0
      %p132 = por %p130, %p131
      %p133 = scmp.ne.s32.totalorder %s121, %s122
      %p134 = scmp.eq.s32.totalorder %s28, 1
      %p135 = por %p133, %p134
      %p137 = scmp.ne.s32.totalorder %s122, %s136
      %p138 = scmp.eq.s32.totalorder %s28, 0
      %p139 = por %p137, %p138
      %s141 = sadd.s32 %s140, 1
      %p144 = scmp.eq.s32.totalorder %s22, 1
      %p145 = scmp.ne.s32.totalorder %s140, %s142
      %p146 = scmp.eq.s32.totalorder %s22, 0
      %p147 = por %p145, %p146
      %p148 = scmp.ne.s32.totalorder %s140, %s142
      %p149 = scmp.eq.s32.totalorder %s27, 1
      %p150 = por %p148, %p149
      %p151 = scmp.ne.s32.totalorder %s142, %s143
      %p152 = scmp.eq.s32.totalorder %s27, 0
      %p153 = por %p151, %p152
      %p154 = scmp.ne.s32.totalorder %s142, %s143
      %p155 = scmp.eq.s32.totalorder %s28, 1
      %p156 = por %p154, %p155
      %p158 = scmp.ne.s32.totalorder %s143, %s157
      %p159 = scmp.eq.s32.totalorder %s28, 0
      %p160 = por %p158, %p159
      %s162 = sadd.s32 %s161, 1
      %p165 = scmp.eq.s32.totalorder %s22, 1
      %p166 = scmp.ne.s32.totalorder %s161, %s163
      %p167 = scmp.eq.s32.totalorder %s22, 0
      %p168 = por %p166, %p167
      %p169 = scmp.ne.s32.totalorder %s161, %s163
      %p170 = scmp.eq.s32.totalorder %s27, 1
      %p171 = por %p169, %p170
      %p172 = scmp.ne.s32.totalorder %s163, %s164
      %p173 = scmp.eq.s32.totalorder %s27, 0
      %p174 = por %p172, %p173
      %p175 = scmp.ne.s32.totalorder %s163, %s164
      %p176 = scmp.eq.s32.totalorder %s28, 1
      %p177 = por %p175, %p176
      %p179 = scmp.ne.s32.totalorder %s164, %s178
      %p180 = scmp.eq.s32.totalorder %s28, 0
      %p181 = por %p179, %p180
      %s183 = sadd.s32 %s182, 1
      %p186 = scmp.eq.s32.totalorder %s22, 1
      %p187 = scmp.ne.s32.totalorder %s182, %s184
      %p188 = scmp.eq.s32.totalorder %s22, 0
      %p189 = por %p187, %p188
      %p190 = scmp.ne.s32.totalorder %s182, %s184
      %p191 = scmp.eq.s32.totalorder %s27, 1
      %p192 = por %p190, %p191
      %p193 = scmp.ne.s32.totalorder %s184, %s185
      %p194 = scmp.eq.s32.totalorder %s27, 0
      %p195 = por %p193, %p194
      %p196 = scmp.ne.s32.totalorder %s184, %s185
      %p197 = scmp.eq.s32.totalorder %s28, 1
      %p198 = por %p196, %p197
      %p200 = scmp.ne.s32.totalorder %s185, %s199
      %p201 = scmp.eq.s32.totalorder %s28, 0
      %p202 = por %p200, %p201
      %s204 = sadd.s32 %s203, 1
      %p207 = scmp.eq.s32.totalorder %s22, 1
      %p208 = scmp.ne.s32.totalorder %s203, %s205
      %p209 = scmp.eq.s32.totalorder %s22, 0
      %p210 = por %p208, %p209
      %p211 = scmp.ne.s32.totalorder %s203, %s205
      %p212 = scmp.eq.s32.totalorder %s27, 1
      %p213 = por %p211, %p212
      %p214 = scmp.ne.s32.totalorder %s205, %s206
      %p215 = scmp.eq.s32.totalorder %s27, 0
      %p216 = por %p214, %p215
      %p217 = scmp.ne.s32.totalorder %s205, %s206
      %p218 = scmp.eq.s32.totalorder %s28, 1
      %p219 = por %p217, %p218
      %p221 = scmp.ne.s32.totalorder %s206, %s220
      %p222 = scmp.eq.s32.totalorder %s28, 0
      %p223 = por %p221, %p222
      %s224 = ssub.s32 %s22, %s29
      %p225 = scmp.eq.s32.totalorder %s224, 0
      %s227 = sadd.s32 %s226, 1
      %s228 = scalar_select %p225, %s226, %s227
      %p231 = pneg %p225
      %p232 = scmp.eq.s32.totalorder %s22, 1
      %p233 = por %p231, %p232
      %p234 = scmp.ne.s32.totalorder %s226, %s229
      %p235 = scmp.eq.s32.totalorder %s22, 0
      %p236 = por %p234, %p235
      %p237 = scmp.ne.s32.totalorder %s226, %s229
      %p238 = scmp.eq.s32.totalorder %s27, 1
      %p239 = por %p237, %p238
      %p240 = scmp.ne.s32.totalorder %s229, %s230
      %p241 = scmp.eq.s32.totalorder %s27, 0
      %p242 = por %p240, %p241
      %p243 = scmp.ne.s32.totalorder %s229, %s230
      %p244 = scmp.eq.s32.totalorder %s28, 1
      %p245 = por %p243, %p244
      %p247 = scmp.ne.s32.totalorder %s230, %s246
      %p248 = scmp.eq.s32.totalorder %s28, 0
      %p249 = por %p247, %p248
      %p250 = scmp.le.s32.totalorder 1, %s22
      %p251 = scmp.lt.s32.totalorder %s22, 3
      %p252 = pnand %p250, %p251
      %p253 = pneg %p252
      // Predicated region
      $region9: #{tpu_custom_call.1} parent=5 // pred_check
        _
      $region10: #{tpu_custom_call.1} parent=5 // pred_check_branch
        %255 = sbr.rel (%p252) target = $region12
      $region11: #{tpu_custom_call.1} parent=5 // pred_region
        %s256 = ssub.s32 %s22, 1
        // Predicated region
        $region13: #{tpu_custom_call.1} parent=11 // pred_check
          %p257 = pneg %p69
        $region14: #{tpu_custom_call.1} parent=11 // pred_check_branch
          %259 = sbr.rel (%p257) target = $region16
        $region15: #{tpu_custom_call.1} parent=11 // pred_region
          %261 = vsyncadd [#allocation7], 0
          %s263 = sshll.u32 %s1, 4
          %s264 = int_to_ptr.hbm [resolvable:$true] %s263
          %s265 = sshll.u32 [#allocation6], 4
          %s266 = int_to_ptr.vmem [resolvable:$true] %s265
          %268 = dma.hbm_to_vmem [thread:$0]  %s264, 128, %s266, [#allocation7]
        $region16: #{tpu_custom_call.1} parent=11 // pred_fallthru
          _
        // Predicated region
        $region17: #{tpu_custom_call.1} parent=11 // pred_check
          %p269 = pneg %p90
        $region18: #{tpu_custom_call.1} parent=11 // pred_check_branch
          %271 = sbr.rel (%p269) target = $region20
        $region19: #{tpu_custom_call.1} parent=11 // pred_region
          _
        $region20: #{tpu_custom_call.1} parent=11 // pred_fallthru
          _
        // Predicated region
        $region21: #{tpu_custom_call.1} parent=11 // pred_check
          %p272 = pneg %p111
        $region22: #{tpu_custom_call.1} parent=11 // pred_check_branch
          %274 = sbr.rel (%p272) target = $region24
        $region23: #{tpu_custom_call.1} parent=11 // pred_region
          _
        $region24: #{tpu_custom_call.1} parent=11 // pred_fallthru
          _
        // Predicated region
        $region25: #{tpu_custom_call.1} parent=11 // pred_check
          %p275 = pneg %p132
        $region26: #{tpu_custom_call.1} parent=11 // pred_check_branch
          %277 = sbr.rel (%p275) target = $region28
        $region27: #{tpu_custom_call.1} parent=11 // pred_region
          _
        $region28: #{tpu_custom_call.1} parent=11 // pred_fallthru
          _
        // Predicated region
        $region29: #{tpu_custom_call.1} parent=11 // pred_check
          %p278 = pneg %p153
        $region30: #{tpu_custom_call.1} parent=11 // pred_check_branch
          %280 = sbr.rel (%p278) target = $region32
        $region31: #{tpu_custom_call.1} parent=11 // pred_region
          %282 = vsyncadd [#allocation7], 0
          %s284 = sshll.u32 %s5, 4
          %s285 = int_to_ptr.hbm [resolvable:$true] %s284
          %s286 = sshll.u32 [#allocation8], 4
          %s287 = int_to_ptr.vmem [resolvable:$true] %s286
          %289 = dma.hbm_to_vmem [thread:$0]  %s285, 128, %s287, [#allocation7]
        $region32: #{tpu_custom_call.1} parent=11 // pred_fallthru
          _
        // Predicated region
        $region33: #{tpu_custom_call.1} parent=11 // pred_check
          %p290 = pneg %p174
        $region34: #{tpu_custom_call.1} parent=11 // pred_check_branch
          %292 = sbr.rel (%p290) target = $region36
        $region35: #{tpu_custom_call.1} parent=11 // pred_region
          _
        $region36: #{tpu_custom_call.1} parent=11 // pred_fallthru
          _
        // Predicated region
        $region37: #{tpu_custom_call.1} parent=11 // pred_check
          %p293 = pneg %p195
        $region38: #{tpu_custom_call.1} parent=11 // pred_check_branch
          %295 = sbr.rel (%p293) target = $region40
        $region39: #{tpu_custom_call.1} parent=11 // pred_region
          _
        $region40: #{tpu_custom_call.1} parent=11 // pred_fallthru
          _
        // Predicated region
        $region41: #{tpu_custom_call.1} parent=11 // pred_check
          %p296 = pneg %p216
        $region42: #{tpu_custom_call.1} parent=11 // pred_check_branch
          %298 = sbr.rel (%p296) target = $region44
        $region43: #{tpu_custom_call.1} parent=11 // pred_region
          _
        $region44: #{tpu_custom_call.1} parent=11 // pred_fallthru
          _
      $region12: #{tpu_custom_call.1} parent=5 // pred_fallthru
        _
      %p299 = scmp.lt.s32.totalorder %s22, 2
      // Predicated region
      $region45: #{tpu_custom_call.1} parent=5 // pred_check
        %p300 = pneg %p299
      $region46: #{tpu_custom_call.1} parent=5 // pred_check_branch
        %302 = sbr.rel (%p300) target = $region48
      $region47: #{tpu_custom_call.1} parent=5 // pred_region
        // Predicated region
        $region49: #{tpu_custom_call.1} parent=47 // pred_check
          %p303 = pneg %p42
        $region50: #{tpu_custom_call.1} parent=47 // pred_check_branch
          %305 = sbr.rel (%p303) target = $region52
        $region51: #{tpu_custom_call.1} parent=47 // pred_region
          %s306 = sand.u32 %s32, 1
          %s307 = scalar_lea.sflag [#allocation4], %s306
          %s308 = sand.u32 %s32, 1
          %s309 = smul.addr %s308, 8
          %s310 = scalar_lea.vmem [#allocation3], %s309
          %312 = vsyncadd %s307, 0
          %s313 = smul.addr %s22, 8
          %s314 = scalar_lea.hbm %s0, %s313
          %s316 = sshll.u32 %s314, 4
          %s317 = int_to_ptr.hbm [resolvable:$true] %s316
          %s318 = sshll.u32 %s310, 4
          %s319 = int_to_ptr.vmem [resolvable:$true] %s318
          %321 = dma.hbm_to_vmem [thread:$0]  %s317, 128, %s319, %s307
        $region52: #{tpu_custom_call.1} parent=47 // pred_fallthru
          _
      $region48: #{tpu_custom_call.1} parent=5 // pred_fallthru
        _
      %p322 = scmp.le.s32.totalorder 1, %s22
      %p323 = scmp.lt.s32.totalorder %s22, 3
      %p324 = pnand %p322, %p323
      %p325 = pneg %p324
      // Predicated region
      $region53: #{tpu_custom_call.1} parent=5 // pred_check
        _
      $region54: #{tpu_custom_call.1} parent=5 // pred_check_branch
        %327 = sbr.rel (%p324) target = $region56
      $region55: #{tpu_custom_call.1} parent=5 // pred_region
        %s328 = ssub.s32 %s22, 1
        %s329 = sand.u32 %s35, 1
        %s330 = scalar_lea.sflag [#allocation4], %s329
        %s331 = sand.u32 %s35, 1
        %s332 = smul.addr %s331, 8
        %s333 = scalar_lea.vmem [#allocation3], %s332
        // Predicated region
        $region57: #{tpu_custom_call.1} parent=55 // pred_check
          %p334 = pneg %p48
        $region58: #{tpu_custom_call.1} parent=55 // pred_check_branch
          %336 = sbr.rel (%p334) target = $region60
        $region59: #{tpu_custom_call.1} parent=55 // pred_region
          %338 = dma.done %s330, 128
        $region60: #{tpu_custom_call.1} parent=55 // pred_fallthru
          _
        // Predicated region
        $region61: #{tpu_custom_call.1} parent=55 // pred_check
          %p339 = pneg %p69
        $region62: #{tpu_custom_call.1} parent=55 // pred_check_branch
          %341 = sbr.rel (%p339) target = $region64
        $region63: #{tpu_custom_call.1} parent=55 // pred_region
          %343 = dma.done [#allocation7], 128
        $region64: #{tpu_custom_call.1} parent=55 // pred_fallthru
          _
        // Predicated region
        $region65: #{tpu_custom_call.1} parent=55 // pred_check
          %p344 = pneg %p153
        $region66: #{tpu_custom_call.1} parent=55 // pred_check_branch
          %346 = sbr.rel (%p344) target = $region68
        $region67: #{tpu_custom_call.1} parent=55 // pred_region
          %348 = dma.done [#allocation7], 128
        $region68: #{tpu_custom_call.1} parent=55 // pred_fallthru
          _
        %s349 = sand.u32 %s35, 1
        %s350 = scalar_lea.sflag [#allocation4], %s349
        %s351 = sand.u32 %s35, 1
        %s352 = smul.addr %s351, 8
        %s353 = scalar_lea.vmem [#allocation3], %s352
        %p354 = pneg %p48
        %p355 = pneg %p45
        %p356 = pneg %p69
        %p357 = pneg %p66
        %p358 = pneg %p90
        %p359 = pneg %p87
        %p360 = pneg %p111
        %p361 = pneg %p108
        %p362 = pneg %p132
        %p363 = pneg %p129
        %p364 = pneg %p153
        %p365 = pneg %p150
        %p366 = pneg %p174
        %p367 = pneg %p171
        %p368 = pneg %p195
        %p369 = pneg %p192
        %p370 = pneg %p216
        %p371 = pneg %p213
        %p372 = pneg %p242
        %p373 = pneg %p239
        %s374 = sand.u32 %s229, 1
        %s375 = scalar_lea.sflag [#allocation5], %s374
        %s376 = sand.u32 %s229, 1
        %s377 = smul.addr %s376, 8
        %s378 = scalar_lea.vmem [#allocation9], %s377
        %v379 = vld [vmem:[%s333] sm:$0xff]
        %v380 = vld [vmem:[%s2] sm:$0xff]
        %v381 = vld [vmem:[%s2 + $0x8] sm:$0xff]
        %v382 = vld [vmem:[%s2 + $0x10] sm:$0xff]
        %v383 = vld [vmem:[%s2 + $0x18] sm:$0xff]
        %v384 = vld [vmem:[%s3] sm:$0x1]
        %v386 = vperm.slane %v384, 0
        %vm388 = vcmask 261120
        %v390 = vsel %vm388, %v379, 0
        %392 = vmatpush.msra.mxu0 0.0
        %393 = vmatpush.msra.mxu0 0.0
        %394 = vmatpush.msra.mxu0 0.0
        %395 = vmatpush.msra.mxu0 0.0
        %396 = vmatpush.msra.mxu0 0.0
        %397 = vmatpush.msra.mxu0 0.0
        %398 = vmatpush.msra.mxu0 0.0
        %399 = vmatpush.msra.mxu0 0.0
        %400 = vmatpush.msra.mxu0 0.0
        %401 = vmatpush.msra.mxu0 0.0
        %402 = vmatpush.msra.mxu0 0.0
        %403 = vmatpush.msra.mxu0 0.0
        %404 = vmatpush.msra.mxu0 %v383
        %405 = vmatpush.msra.mxu0 %v382
        %406 = vmatpush.msra.mxu0 %v381
        %407 = vmatpush.msra.mxu0 %v380
        %408 = vmatmul.f32.gmra.mxu0 %v390
        %v409 = vpop.f32.mrf.mxu0
        %v410 = vadd.f32 %v386, %v409
        %411 = vdwg.mxu0
        %vm412 = vcmask 785408
        %413 = vst.msk [vmem:[#allocation2] sm:$0xff] %vm412, %v410
        %v414 = vld [vmem:[#allocation6] sm:$0xff]
        %vm415 = vcmp.eq.s32.totalorder %v414, 0
        %v416 = vld [vmem:[#allocation8] sm:$0x1]
        %v417 = vperm.slane %v416, 0
        %v418 = vadd.f32 %v379, %v417
        %v419 = vld [vmem:[#allocation2] sm:$0xff]
        %v420 = vmul.f32 %v419, 0.35355338
        %422 = vrot.lane.b32.xlu0 %v419, 96
        %v423 = vpop.permute.xlu0 %422
        %vm424 = vcmask 64512
        %v426 = vsel %vm424, %v420, 0
        %v428 = vsel %vm424, %v423, 0
        %430 = vmatpush.xpose.msra.mxu0 0.0
        %431 = vmatpush.xpose.msra.mxu0 0.0
        %432 = vmatpush.xpose.msra.mxu0 0.0
        %433 = vmatpush.xpose.msra.mxu0 0.0
        %434 = vmatpush.xpose.msra.mxu0 0.0
        %435 = vmatpush.xpose.msra.mxu0 0.0
        %436 = vmatpush.xpose.msra.mxu0 0.0
        %437 = vmatpush.xpose.msra.mxu0 0.0
        %438 = vmatpush.xpose.msra.mxu0 0.0
        %439 = vmatpush.xpose.msra.mxu0 0.0
        %440 = vmatpush.xpose.msra.mxu0 0.0
        %441 = vmatpush.xpose.msra.mxu0 0.0
        %442 = vmatpush.xpose.msra.mxu0 0.0
        %443 = vmatpush.xpose.msra.mxu0 0.0
        %444 = vmatpush.xpose.msra.mxu0 0.0
        %445 = vmatpush.xpose.msra.mxu0 %v428
        %446 = vmatmul.f32.gmra.mxu0 %v426
        %v447 = vpop.f32.mrf.mxu0
        %v448 = vadd.f32 0.0, %v447
        %449 = vdwg.mxu0
        %v450 = vsel %vm415, -1e+09, %v448
        %v451 = vsel %vm424, %v450, -inf
        %452 = vmax.xlane.f32.xlu0 %v451
        %v453 = vpop.xlane.xlu0 %452
        %v454 = vsub.f32 %v450, %v453
        %v455 = vmul.f32 %v454, 1.442695
        %v456 = vpow.pop %v455
        %v457 = vsel %vm424, %v456, 0.0
        %458 = vadd.xlane.f32.xlu0 %v457
        %v459 = vpop.xlane.xlu0 %458
        %v460 = vrcp.pop %v459
        %v461 = vmul.f32 %v456, %v460
        %462 = vrot.lane.b32.xlu0 %v419, 64
        %v463 = vpop.permute.xlu0 %462
        %v466 = vsel %vm424, %v461, 0
        %468 = vmatpush.msra.mxu0 0.0
        %469 = vmatpush.msra.mxu0 0.0
        %470 = vmatpush.msra.mxu0 0.0
        %471 = vmatpush.msra.mxu0 0.0
        %472 = vmatpush.msra.mxu0 0.0
        %473 = vmatpush.msra.mxu0 0.0
        %474 = vmatpush.msra.mxu0 0.0
        %475 = vmatpush.msra.mxu0 0.0
        %476 = vmatpush.msra.mxu0 0.0
        %477 = vmatpush.msra.mxu0 0.0
        %478 = vmatpush.msra.mxu0 0.0
        %479 = vmatpush.msra.mxu0 0.0
        %480 = vmatpush.msra.mxu0 0.0
        %481 = vmatpush.msra.mxu0 0.0
        %482 = vmatpush.msra.mxu0 0.0
        %483 = vmatpush.msra.mxu0 %v463
        %484 = vmatmul.f32.gmra.mxu0 %v466
        %v485 = vpop.f32.mrf.mxu0
        %v486 = vadd.f32 0.0, %v485
        %487 = vdwg.mxu0
        %v488 = vld [vmem:[%s4] sm:$0xff]
        %v490 = vsel %vm424, %v486, 0
        %492 = vmatpush.msra.mxu0 0.0
        %493 = vmatpush.msra.mxu0 0.0
        %494 = vmatpush.msra.mxu0 0.0
        %495 = vmatpush.msra.mxu0 0.0
        %496 = vmatpush.msra.mxu0 0.0
        %497 = vmatpush.msra.mxu0 0.0
        %498 = vmatpush.msra.mxu0 0.0
        %499 = vmatpush.msra.mxu0 0.0
        %500 = vmatpush.msra.mxu0 0.0
        %501 = vmatpush.msra.mxu0 0.0
        %502 = vmatpush.msra.mxu0 0.0
        %503 = vmatpush.msra.mxu0 0.0
        %504 = vmatpush.msra.mxu0 0.0
        %505 = vmatpush.msra.mxu0 0.0
        %506 = vmatpush.msra.mxu0 0.0
        %507 = vmatpush.msra.mxu0 %v488
        %508 = vmatmul.f32.gmra.mxu0 %v490
        %v509 = vpop.f32.mrf.mxu0
        %v510 = vadd.f32 0.0, %v509
        %511 = vdwg.mxu0
        %v512 = vadd.f32 %v418, %v510
        %513 = vrot.lane.b32.xlu0 %v420, 120
        %v514 = vpop.permute.xlu0 %513
        %515 = vrot.lane.b32.xlu0 %v419, 88
        %v516 = vpop.permute.xlu0 %515
        %v517 = vsel %vm424, %v514, 0
        %v519 = vsel %vm424, %v516, 0
        %521 = vmatpush.xpose.msra.mxu0 0.0
        %522 = vmatpush.xpose.msra.mxu0 0.0
        %523 = vmatpush.xpose.msra.mxu0 0.0
        %524 = vmatpush.xpose.msra.mxu0 0.0
        %525 = vmatpush.xpose.msra.mxu0 0.0
        %526 = vmatpush.xpose.msra.mxu0 0.0
        %527 = vmatpush.xpose.msra.mxu0 0.0
        %528 = vmatpush.xpose.msra.mxu0 0.0
        %529 = vmatpush.xpose.msra.mxu0 0.0
        %530 = vmatpush.xpose.msra.mxu0 0.0
        %531 = vmatpush.xpose.msra.mxu0 0.0
        %532 = vmatpush.xpose.msra.mxu0 0.0
        %533 = vmatpush.xpose.msra.mxu0 0.0
        %534 = vmatpush.xpose.msra.mxu0 0.0
        %535 = vmatpush.xpose.msra.mxu0 0.0
        %536 = vmatpush.xpose.msra.mxu0 %v519
        %537 = vmatmul.f32.gmra.mxu0 %v517
        %v538 = vpop.f32.mrf.mxu0
        %v539 = vadd.f32 0.0, %v538
        %540 = vdwg.mxu0
        %v541 = vsel %vm415, -1e+09, %v539
        %v542 = vsel %vm424, %v541, -inf
        %543 = vmax.xlane.f32.xlu0 %v542
        %v544 = vpop.xlane.xlu0 %543
        %v545 = vsub.f32 %v541, %v544
        %v546 = vmul.f32 %v545, 1.442695
        %v547 = vpow.pop %v546
        %v548 = vsel %vm424, %v547, 0.0
        %549 = vadd.xlane.f32.xlu0 %v548
        %v550 = vpop.xlane.xlu0 %549
        %v551 = vrcp.pop %v550
        %v552 = vmul.f32 %v547, %v551
        %553 = vrot.lane.b32.xlu0 %v419, 56
        %v554 = vpop.permute.xlu0 %553
        %v557 = vsel %vm424, %v552, 0
        %559 = vmatpush.msra.mxu0 0.0
        %560 = vmatpush.msra.mxu0 0.0
        %561 = vmatpush.msra.mxu0 0.0
        %562 = vmatpush.msra.mxu0 0.0
        %563 = vmatpush.msra.mxu0 0.0
        %564 = vmatpush.msra.mxu0 0.0
        %565 = vmatpush.msra.mxu0 0.0
        %566 = vmatpush.msra.mxu0 0.0
        %567 = vmatpush.msra.mxu0 0.0
        %568 = vmatpush.msra.mxu0 0.0
        %569 = vmatpush.msra.mxu0 0.0
        %570 = vmatpush.msra.mxu0 0.0
        %571 = vmatpush.msra.mxu0 0.0
        %572 = vmatpush.msra.mxu0 0.0
        %573 = vmatpush.msra.mxu0 0.0
        %574 = vmatpush.msra.mxu0 %v554
        %575 = vmatmul.f32.gmra.mxu0 %v557
        %v576 = vpop.f32.mrf.mxu0
        %v577 = vadd.f32 0.0, %v576
        %578 = vdwg.mxu0
        %v579 = vld [vmem:[%s4 + $0x8] sm:$0xff]
        %v581 = vsel %vm424, %v577, 0
        %583 = vmatpush.msra.mxu0 0.0
        %584 = vmatpush.msra.mxu0 0.0
        %585 = vmatpush.msra.mxu0 0.0
        %586 = vmatpush.msra.mxu0 0.0
        %587 = vmatpush.msra.mxu0 0.0
        %588 = vmatpush.msra.mxu0 0.0
        %589 = vmatpush.msra.mxu0 0.0
        %590 = vmatpush.msra.mxu0 0.0
        %591 = vmatpush.msra.mxu0 0.0
        %592 = vmatpush.msra.mxu0 0.0
        %593 = vmatpush.msra.mxu0 0.0
        %594 = vmatpush.msra.mxu0 0.0
        %595 = vmatpush.msra.mxu0 0.0
        %596 = vmatpush.msra.mxu0 0.0
        %597 = vmatpush.msra.mxu0 0.0
        %598 = vmatpush.msra.mxu0 %v579
        %599 = vmatmul.f32.gmra.mxu0 %v581
        %v600 = vpop.f32.mrf.mxu0
        %v601 = vadd.f32 0.0, %v600
        %602 = vdwg.mxu0
        %v603 = vadd.f32 %v512, %v601
        %604 = vrot.lane.b32.xlu0 %v420, 112
        %v605 = vpop.permute.xlu0 %604
        %606 = vrot.lane.b32.xlu0 %v419, 80
        %v607 = vpop.permute.xlu0 %606
        %v608 = vsel %vm424, %v605, 0
        %v610 = vsel %vm424, %v607, 0
        %612 = vmatpush.xpose.msra.mxu0 0.0
        %613 = vmatpush.xpose.msra.mxu0 0.0
        %614 = vmatpush.xpose.msra.mxu0 0.0
        %615 = vmatpush.xpose.msra.mxu0 0.0
        %616 = vmatpush.xpose.msra.mxu0 0.0
        %617 = vmatpush.xpose.msra.mxu0 0.0
        %618 = vmatpush.xpose.msra.mxu0 0.0
        %619 = vmatpush.xpose.msra.mxu0 0.0
        %620 = vmatpush.xpose.msra.mxu0 0.0
        %621 = vmatpush.xpose.msra.mxu0 0.0
        %622 = vmatpush.xpose.msra.mxu0 0.0
        %623 = vmatpush.xpose.msra.mxu0 0.0
        %624 = vmatpush.xpose.msra.mxu0 0.0
        %625 = vmatpush.xpose.msra.mxu0 0.0
        %626 = vmatpush.xpose.msra.mxu0 0.0
        %627 = vmatpush.xpose.msra.mxu0 %v610
        %628 = vmatmul.f32.gmra.mxu0 %v608
        %v629 = vpop.f32.mrf.mxu0
        %v630 = vadd.f32 0.0, %v629
        %631 = vdwg.mxu0
        %v632 = vsel %vm415, -1e+09, %v630
        %v633 = vsel %vm424, %v632, -inf
        %634 = vmax.xlane.f32.xlu0 %v633
        %v635 = vpop.xlane.xlu0 %634
        %v636 = vsub.f32 %v632, %v635
        %v637 = vmul.f32 %v636, 1.442695
        %v638 = vpow.pop %v637
        %v639 = vsel %vm424, %v638, 0.0
        %640 = vadd.xlane.f32.xlu0 %v639
        %v641 = vpop.xlane.xlu0 %640
        %v642 = vrcp.pop %v641
        %v643 = vmul.f32 %v638, %v642
        %644 = vrot.lane.b32.xlu0 %v419, 48
        %v645 = vpop.permute.xlu0 %644
        %v648 = vsel %vm424, %v643, 0
        %650 = vmatpush.msra.mxu0 0.0
        %651 = vmatpush.msra.mxu0 0.0
        %652 = vmatpush.msra.mxu0 0.0
        %653 = vmatpush.msra.mxu0 0.0
        %654 = vmatpush.msra.mxu0 0.0
        %655 = vmatpush.msra.mxu0 0.0
        %656 = vmatpush.msra.mxu0 0.0
        %657 = vmatpush.msra.mxu0 0.0
        %658 = vmatpush.msra.mxu0 0.0
        %659 = vmatpush.msra.mxu0 0.0
        %660 = vmatpush.msra.mxu0 0.0
        %661 = vmatpush.msra.mxu0 0.0
        %662 = vmatpush.msra.mxu0 0.0
        %663 = vmatpush.msra.mxu0 0.0
        %664 = vmatpush.msra.mxu0 0.0
        %665 = vmatpush.msra.mxu0 %v645
        %666 = vmatmul.f32.gmra.mxu0 %v648
        %v667 = vpop.f32.mrf.mxu0
        %v668 = vadd.f32 0.0, %v667
        %669 = vdwg.mxu0
        %v670 = vld [vmem:[%s4 + $0x10] sm:$0xff]
        %v672 = vsel %vm424, %v668, 0
        %674 = vmatpush.msra.mxu0 0.0
        %675 = vmatpush.msra.mxu0 0.0
        %676 = vmatpush.msra.mxu0 0.0
        %677 = vmatpush.msra.mxu0 0.0
        %678 = vmatpush.msra.mxu0 0.0
        %679 = vmatpush.msra.mxu0 0.0
        %680 = vmatpush.msra.mxu0 0.0
        %681 = vmatpush.msra.mxu0 0.0
        %682 = vmatpush.msra.mxu0 0.0
        %683 = vmatpush.msra.mxu0 0.0
        %684 = vmatpush.msra.mxu0 0.0
        %685 = vmatpush.msra.mxu0 0.0
        %686 = vmatpush.msra.mxu0 0.0
        %687 = vmatpush.msra.mxu0 0.0
        %688 = vmatpush.msra.mxu0 0.0
        %689 = vmatpush.msra.mxu0 %v670
        %690 = vmatmul.f32.gmra.mxu0 %v672
        %v691 = vpop.f32.mrf.mxu0
        %v692 = vadd.f32 0.0, %v691
        %693 = vdwg.mxu0
        %v694 = vadd.f32 %v603, %v692
        %695 = vrot.lane.b32.xlu0 %v420, 104
        %v696 = vpop.permute.xlu0 %695
        %697 = vrot.lane.b32.xlu0 %v419, 72
        %v698 = vpop.permute.xlu0 %697
        %v699 = vsel %vm424, %v696, 0
        %v701 = vsel %vm424, %v698, 0
        %703 = vmatpush.xpose.msra.mxu0 0.0
        %704 = vmatpush.xpose.msra.mxu0 0.0
        %705 = vmatpush.xpose.msra.mxu0 0.0
        %706 = vmatpush.xpose.msra.mxu0 0.0
        %707 = vmatpush.xpose.msra.mxu0 0.0
        %708 = vmatpush.xpose.msra.mxu0 0.0
        %709 = vmatpush.xpose.msra.mxu0 0.0
        %710 = vmatpush.xpose.msra.mxu0 0.0
        %711 = vmatpush.xpose.msra.mxu0 0.0
        %712 = vmatpush.xpose.msra.mxu0 0.0
        %713 = vmatpush.xpose.msra.mxu0 0.0
        %714 = vmatpush.xpose.msra.mxu0 0.0
        %715 = vmatpush.xpose.msra.mxu0 0.0
        %716 = vmatpush.xpose.msra.mxu0 0.0
        %717 = vmatpush.xpose.msra.mxu0 0.0
        %718 = vmatpush.xpose.msra.mxu0 %v701
        %719 = vmatmul.f32.gmra.mxu0 %v699
        %v720 = vpop.f32.mrf.mxu0
        %v721 = vadd.f32 0.0, %v720
        %722 = vdwg.mxu0
        %v723 = vsel %vm415, -1e+09, %v721
        %v724 = vsel %vm424, %v723, -inf
        %725 = vmax.xlane.f32.xlu0 %v724
        %v726 = vpop.xlane.xlu0 %725
        %v727 = vsub.f32 %v723, %v726
        %v728 = vmul.f32 %v727, 1.442695
        %v729 = vpow.pop %v728
        %v730 = vsel %vm424, %v729, 0.0
        %731 = vadd.xlane.f32.xlu0 %v730
        %v732 = vpop.xlane.xlu0 %731
        %v733 = vrcp.pop %v732
        %v734 = vmul.f32 %v729, %v733
        %735 = vrot.lane.b32.xlu0 %v419, 40
        %v736 = vpop.permute.xlu0 %735
        %v739 = vsel %vm424, %v734, 0
        %741 = vmatpush.msra.mxu0 0.0
        %742 = vmatpush.msra.mxu0 0.0
        %743 = vmatpush.msra.mxu0 0.0
        %744 = vmatpush.msra.mxu0 0.0
        %745 = vmatpush.msra.mxu0 0.0
        %746 = vmatpush.msra.mxu0 0.0
        %747 = vmatpush.msra.mxu0 0.0
        %748 = vmatpush.msra.mxu0 0.0
        %749 = vmatpush.msra.mxu0 0.0
        %750 = vmatpush.msra.mxu0 0.0
        %751 = vmatpush.msra.mxu0 0.0
        %752 = vmatpush.msra.mxu0 0.0
        %753 = vmatpush.msra.mxu0 0.0
        %754 = vmatpush.msra.mxu0 0.0
        %755 = vmatpush.msra.mxu0 0.0
        %756 = vmatpush.msra.mxu0 %v736
        %757 = vmatmul.f32.gmra.mxu0 %v739
        %v758 = vpop.f32.mrf.mxu0
        %v759 = vadd.f32 0.0, %v758
        %760 = vdwg.mxu0
        %v761 = vld [vmem:[%s4 + $0x18] sm:$0xff]
        %v763 = vsel %vm424, %v759, 0
        %765 = vmatpush.msra.mxu0 0.0
        %766 = vmatpush.msra.mxu0 0.0
        %767 = vmatpush.msra.mxu0 0.0
        %768 = vmatpush.msra.mxu0 0.0
        %769 = vmatpush.msra.mxu0 0.0
        %770 = vmatpush.msra.mxu0 0.0
        %771 = vmatpush.msra.mxu0 0.0
        %772 = vmatpush.msra.mxu0 0.0
        %773 = vmatpush.msra.mxu0 0.0
        %774 = vmatpush.msra.mxu0 0.0
        %775 = vmatpush.msra.mxu0 0.0
        %776 = vmatpush.msra.mxu0 0.0
        %777 = vmatpush.msra.mxu0 0.0
        %778 = vmatpush.msra.mxu0 0.0
        %779 = vmatpush.msra.mxu0 0.0
        %780 = vmatpush.msra.mxu0 %v761
        %781 = vmatmul.f32.gmra.mxu0 %v763
        %v782 = vpop.f32.mrf.mxu0
        %v783 = vadd.f32 0.0, %v782
        %784 = vdwg.mxu0
        %v785 = vadd.f32 %v694, %v783
        %v786 = vld [vmem:[#allocation8 + $0x1] sm:$0x1]
        %v787 = vld [vmem:[#allocation8 + $0x2] sm:$0x1]
        %v788 = vsel %vm388, %v785, 0.0
        %789 = vadd.xlane.f32.xlu0 %v788
        %v790 = vpop.xlane.xlu0 %789
        %v791 = vrcp.pop 32.0
        %v792 = vmul.f32 32.0, %v791
        %v793 = vsub.f32 1.0, %v792
        %v794 = vmul.f32 %v791, %v793
        %v795 = vadd.f32 %v791, %v794
        %vm796 = vweird.f32 %v791
        %v797 = vsel %vm796, %v791, %v795
        %v798 = vmul.f32 %v790, %v797
        %v799 = vsub.f32 %v785, %v798
        %v800 = vmul.f32 %v799, %v799
        %v801 = vsel %vm388, %v800, 0.0
        %802 = vadd.xlane.f32.xlu0 %v801
        %v803 = vpop.xlane.xlu0 %802
        %v804 = vmul.f32 %v803, %v797
        %v805 = vadd.f32 %v804, 1e-05
        %v806 = vrsqrt.pop %v805
        %v807 = vmul.f32 %v806, %v805
        %v808 = vmul.f32 %v807, %v806
        %v809 = vmul.f32 0.5, %v808
        %v810 = vsub.f32 1.5, %v809
        %v811 = vmul.f32 %v806, %v810
        %vm812 = vweird.f32 %v805
        %vm813 = vweird.f32 %v806
        %vm814 = vmor %vm812, %vm813
        %v815 = vsel %vm814, %v806, %v811
        %v816 = vmul.f32 %v799, %v815
        %v817 = vperm.slane %v786, 0
        %v818 = vmul.f32 %v816, %v817
        %v819 = vperm.slane %v787, 0
        %v820 = vadd.f32 %v818, %v819
        %v821 = vld [vmem:[%s6] sm:$0xff]
        %v822 = vld [vmem:[%s6 + $0x8] sm:$0xff]
        %v823 = vld [vmem:[%s6 + $0x10] sm:$0xff]
        %v824 = vld [vmem:[%s6 + $0x18] sm:$0xff]
        %v825 = vld [vmem:[%s7] sm:$0x1]
        %v827 = vperm.slane %v825, 0
        %v830 = vsel %vm388, %v820, 0
        %832 = vmatpush.msra.mxu0 0.0
        %833 = vmatpush.msra.mxu0 0.0
        %834 = vmatpush.msra.mxu0 0.0
        %835 = vmatpush.msra.mxu0 0.0
        %836 = vmatpush.msra.mxu0 0.0
        %837 = vmatpush.msra.mxu0 0.0
        %838 = vmatpush.msra.mxu0 0.0
        %839 = vmatpush.msra.mxu0 0.0
        %840 = vmatpush.msra.mxu0 0.0
        %841 = vmatpush.msra.mxu0 0.0
        %842 = vmatpush.msra.mxu0 0.0
        %843 = vmatpush.msra.mxu0 0.0
        %844 = vmatpush.msra.mxu0 %v824
        %845 = vmatpush.msra.mxu0 %v823
        %846 = vmatpush.msra.mxu0 %v822
        %847 = vmatpush.msra.mxu0 %v821
        %848 = vmatmul.f32.gmra.mxu0 %v830
        %v849 = vpop.f32.mrf.mxu0
        %v850 = vadd.f32 %v827, %v849
        %851 = vdwg.mxu0
        %v852 = vmax.f32 %v850, 0.0
        %v853 = vld [vmem:[#allocation8 + $0x3] sm:$0x1]
        %v854 = vperm.slane %v853, 0
        %v855 = vadd.f32 %v820, %v854
        %v856 = vld [vmem:[%s8] sm:$0xff]
        %v857 = vld [vmem:[%s8 + $0x8] sm:$0xff]
        %v858 = vld [vmem:[%s8 + $0x10] sm:$0xff]
        %v859 = vld [vmem:[%s8 + $0x18] sm:$0xff]
        %v860 = vld [vmem:[%s8 + $0x20] sm:$0xff]
        %v861 = vld [vmem:[%s8 + $0x28] sm:$0xff]
        %v862 = vld [vmem:[%s8 + $0x30] sm:$0xff]
        %v863 = vld [vmem:[%s8 + $0x38] sm:$0xff]
        %vm864 = vcmask 523264
        %v866 = vsel %vm864, %v852, 0
        %868 = vmatpush.msra.mxu0 0.0
        %869 = vmatpush.msra.mxu0 0.0
        %870 = vmatpush.msra.mxu0 0.0
        %871 = vmatpush.msra.mxu0 0.0
        %872 = vmatpush.msra.mxu0 0.0
        %873 = vmatpush.msra.mxu0 0.0
        %874 = vmatpush.msra.mxu0 0.0
        %875 = vmatpush.msra.mxu0 0.0
        %876 = vmatpush.msra.mxu0 %v863
        %877 = vmatpush.msra.mxu0 %v862
        %878 = vmatpush.msra.mxu0 %v861
        %879 = vmatpush.msra.mxu0 %v860
        %880 = vmatpush.msra.mxu0 %v859
        %881 = vmatpush.msra.mxu0 %v858
        %882 = vmatpush.msra.mxu0 %v857
        %883 = vmatpush.msra.mxu0 %v856
        %884 = vmatmul.f32.gmra.mxu0 %v866
        %v885 = vpop.f32.mrf.mxu0
        %v886 = vadd.f32 0.0, %v885
        %887 = vdwg.mxu0
        %v888 = vadd.f32 %v855, %v886
        %v889 = vld [vmem:[#allocation8 + $0x4] sm:$0x1]
        %v890 = vld [vmem:[#allocation8 + $0x5] sm:$0x1]
        %v891 = vsel %vm388, %v888, 0.0
        %892 = vadd.xlane.f32.xlu0 %v891
        %v893 = vpop.xlane.xlu0 %892
        %v894 = vmul.f32 %v893, %v797
        %v895 = vsub.f32 %v888, %v894
        %v896 = vmul.f32 %v895, %v895
        %v897 = vsel %vm388, %v896, 0.0
        %898 = vadd.xlane.f32.xlu0 %v897
        %v899 = vpop.xlane.xlu0 %898
        %v900 = vmul.f32 %v899, %v797
        %v901 = vadd.f32 %v900, 1e-05
        %v902 = vrsqrt.pop %v901
        %v903 = vmul.f32 %v902, %v901
        %v904 = vmul.f32 %v903, %v902
        %v905 = vmul.f32 0.5, %v904
        %v906 = vsub.f32 1.5, %v905
        %v907 = vmul.f32 %v902, %v906
        %vm908 = vweird.f32 %v901
        %vm909 = vweird.f32 %v902
        %vm910 = vmor %vm908, %vm909
        %v911 = vsel %vm910, %v902, %v907
        %v912 = vmul.f32 %v895, %v911
        %v913 = vperm.slane %v889, 0
        %v914 = vmul.f32 %v912, %v913
        %v915 = vperm.slane %v890, 0
        %v916 = vadd.f32 %v914, %v915
        %917 = vst.msk [vmem:[%s378] sm:$0xff] %vm388, %v916
        %s918 = sand.u32 %s229, 1
        %s919 = scalar_lea.sflag [#allocation5], %s918
        %s920 = sand.u32 %s229, 1
        %s921 = smul.addr %s920, 8
        %s922 = scalar_lea.vmem [#allocation9], %s921
        // Predicated region
        $region69: #{tpu_custom_call.1} parent=55 // pred_check
          %p923 = pneg %p239
        $region70: #{tpu_custom_call.1} parent=55 // pred_check_branch
          %925 = sbr.rel (%p923) target = $region72
        $region71: #{tpu_custom_call.1} parent=55 // pred_region
          %927 = vsyncadd %s919, 0
          %s928 = smul.addr %s27, 8
          %s929 = scalar_lea.hbm %s9, %s928
          %s931 = sshll.u32 %s922, 4
          %s932 = int_to_ptr.vmem [resolvable:$true] %s931
          %s933 = sshll.u32 %s929, 4
          %s934 = int_to_ptr.hbm [resolvable:$true] %s933
          %936 = dma.vmem_to_hbm [thread:$0]  %s932, 128, %s934, %s919
        $region72: #{tpu_custom_call.1} parent=55 // pred_fallthru
          _
      $region56: #{tpu_custom_call.1} parent=5 // pred_fallthru
        _
      %p937 = scmp.le.s32.totalorder 2, %s22
      // Predicated region
      $region73: #{tpu_custom_call.1} parent=5 // pred_check
        %p938 = pneg %p937
      $region74: #{tpu_custom_call.1} parent=5 // pred_check_branch
        %940 = sbr.rel (%p938) target = $region76
      $region75: #{tpu_custom_call.1} parent=5 // pred_region
        %s941 = ssub.s32 %s22, 2
        // Predicated region
        $region77: #{tpu_custom_call.1} parent=75 // pred_check
          %p942 = pneg %p245
        $region78: #{tpu_custom_call.1} parent=75 // pred_check_branch
          %944 = sbr.rel (%p942) target = $region80
        $region79: #{tpu_custom_call.1} parent=75 // pred_region
          %s945 = sand.u32 %s230, 1
          %s946 = scalar_lea.sflag [#allocation5], %s945
          %s947 = sand.u32 %s230, 1
          %s948 = smul.addr %s947, 8
          %s949 = scalar_lea.vmem [#allocation9], %s948
          %951 = dma.done %s946, 128
        $region80: #{tpu_custom_call.1} parent=75 // pred_fallthru
          _
      $region76: #{tpu_custom_call.1} parent=5 // pred_fallthru
        _
    $region6: #{tpu_custom_call.1} parent=1 // loop_footer
      %s26 = sadd.s32 1, %s22
    $region7: #{tpu_custom_call.1} parent=1 // loop_footer_branch
      %21 = sbr.rel target = $region3
    $region8: #{tpu_custom_call.1} parent=1 // loop_exit
      _
    %952 = vsyncpa [#allocation4], 1
    %s953 = scalar_lea.sflag [#allocation4], 1
    %954 = vsyncpa %s953, 1
    %955 = vsyncpa [#allocation7], 1
    %956 = vsyncpa [#allocation5], 1
    %s957 = scalar_lea.sflag [#allocation5], 1
    %958 = vsyncpa %s957, 1

</llo_original>
